<compile_context>
chip_gen: v5e
topology: v5e:2x2
jax: 0.10.0
libtpu: 0.0.40
codegen_flags: <defaults>
</compile_context>

<pallas_src>
import math
import functools

import jax
import jax.numpy as jnp
from jax.experimental import pallas as pl
from jax.experimental.pallas import tpu as pltpu

ACT_LIMIT = 10.0                                   # FlowSAC default act_limit
EPS1 = 1.0 - 1e-4                                  # clamp bound used by to_box
ATANH_EPS1 = 0.5 * math.log((1.0 + EPS1) / (1.0 - EPS1))  # atanh(1-1e-4) ~ 4.9517

_LANE = 128
_SUBLANE = 8
_MAX_BLOCK_COLS = 32768    # batch-columns per grid step (per-step VMEM ~2.6 MB at G=4)
_MIN_PALLAS_B = 8192       # below this the pallas_call fixed cost dominates -> plain XLA


def _round_up(x, m):
    return ((x + m - 1) // m) * m


def _flow_sac_kernel(x_ref, action_ref, logprob_ref, *, num_feat, groups, scale, lp_const):
    """One packed batch tile.

    x_ref       : (A*G, TC) f32; rows [f*G:(f+1)*G] hold feature f of G batch groups
    action_ref  : (A*G, TC) act_limit * clamp(tanh(flow(x)))   (same packed layout)
    logprob_ref : (G,  TC)  base logprob + flow jacobian + tanh/scale log-det
    """
    x = x_ref[...]                                         # dense (8, TC) vregs

    # to_box: clamp directly in atanh-space (== clamp(tanh(x), +-(1-1e-4)) by
    # monotonicity), then a single tanh per element.
    a_t = jnp.clip(x, -ATANH_EPS1, ATANH_EPS1)
    a = jnp.tanh(a_t)                                      # |a| <= 1 - 1e-4
    action_ref[...] = scale * a

    # Per-batch-element reductions over the A features: contiguous G-row slices.
    xf = x[0:groups]
    af = a[0:groups]
    sq = xf * xf                                           # (G, TC)
    prod = 1.0 - af * af                                   # >= ~2e-4 elementwise
    for f in range(1, num_feat):                           # static, tiny A
        xf = x[f * groups:(f + 1) * groups]
        af = a[f * groups:(f + 1) * groups]
        sq = sq + xf * xf
        prod = prod * (1.0 - af * af)

    # log_prob = -0.5*||x||^2 - log(prod(1 - a^2)) + [-(A/2)log(2pi) - A*log(scale)]
    # (one EUP log per batch element instead of A log1p's)
    logprob_ref[...] = -0.5 * sq - jnp.log(prod) + lp_const


def _pack(x, groups, cols):
    """(B, A) batch-major -> (A*G, cols) packed; rows [f*G:(f+1)*G] = feature f."""
    B, A = x.shape
    b_pad = groups * cols
    if b_pad != B:
        x = jnp.pad(x, ((0, b_pad - B), (0, 0)))           # zero pad: stays NaN-free
    return x.reshape(groups, cols, A).transpose(2, 0, 1).reshape(A * groups, cols)


def _unpack_action(action_packed, groups, cols, B, A):
    return (action_packed.reshape(A, groups, cols)
            .transpose(1, 2, 0).reshape(groups * cols, A)[:B])


def _flow_sac_pallas_packed(x_packed, *, num_feat, groups, cols, tile_cols, act_limit):
    """Core pallas_call on an already-packed (A*G, cols) array (no boundary copies)."""
    rows = num_feat * groups
    nblk = cols // tile_cols
    lp_const = (-0.5 * num_feat * math.log(2.0 * math.pi)
                - num_feat * math.log(float(act_limit)))
    kernel = functools.partial(_flow_sac_kernel, num_feat=num_feat, groups=groups,
                               scale=float(act_limit), lp_const=lp_const)
    return pl.pallas_call(
        kernel,
        out_shape=(
            jax.ShapeDtypeStruct((rows, cols), jnp.float32),    # action (packed)
            jax.ShapeDtypeStruct((groups, cols), jnp.float32),  # log_prob (lane-dense)
        ),
        grid=(nblk,),
        in_specs=[pl.BlockSpec((rows, tile_cols), lambda i: (0, i))],
        out_specs=(
            pl.BlockSpec((rows, tile_cols), lambda i: (0, i)),
            pl.BlockSpec((groups, tile_cols), lambda i: (0, i)),
        ),
        compiler_params=pltpu.CompilerParams(
            dimension_semantics=("parallel",)),
        cost_estimate=pl.CostEstimate(
            flops=8 * rows * cols,
            transcendentals=(num_feat + 1) * groups * cols,
            bytes_accessed=4 * (2 * rows + groups) * cols),
    )(x_packed)


def _flow_sac_forward_pallas(x_t, act_limit):
    B, A = x_t.shape
    groups = max(1, _SUBLANE // A)                          # G batch groups per sublane tile
    cols_needed = -(-B // groups)
    if cols_needed <= _MAX_BLOCK_COLS:
        nblk = 1                                            # whole padded batch, one block
        tile_cols = _round_up(cols_needed, _LANE)
    else:
        nblk = -(-cols_needed // _MAX_BLOCK_COLS)
        if nblk % 2 == 1:
            nblk += 1                                       # even steps -> v7x 2-TC split
        tile_cols = _round_up(-(-cols_needed // nblk), _LANE)
    cols = tile_cols * nblk

    x_packed = _pack(x_t.astype(jnp.float32), groups, cols)
    action_packed, lp_packed = _flow_sac_pallas_packed(
        x_packed, num_feat=A, groups=groups, cols=cols, tile_cols=tile_cols,
        act_limit=act_limit)

    action = _unpack_action(action_packed, groups, cols, B, A)  # (B, A)
    log_prob = lp_packed.reshape(groups * cols)[:B].reshape(B, 1)
    return action, log_prob


def _flow_sac_forward_xla(x_t, act_limit):
    """Plain-JAX path (small batches) and correctness reference for the same math."""
    x = x_t.astype(jnp.float32)
    A = x.shape[1]
    a = jnp.tanh(jnp.clip(x, -ATANH_EPS1, ATANH_EPS1))
    action = act_limit * a
    log_prob = (-0.5 * jnp.sum(x * x, axis=-1, keepdims=True)
                - jnp.sum(jnp.log1p(-a * a), axis=-1, keepdims=True)
                - 0.5 * A * math.log(2.0 * math.pi)
                - A * math.log(float(act_limit)))
    return action, log_prob


def flow_sac_forward(state, x_t, act_limit=ACT_LIMIT, use_pallas=None):
    """JAX/Pallas equivalent of FlowSAC.forward(state), deterministic=False.

    Returns ((action, log_prob, entropy), value) mirroring
    (FlowDistribution(action, log_prob.unsqueeze(-1), entropy), value).
    """
    assert state.shape[0] == x_t.shape[0], "state / x_t batch mismatch"
    B, _ = x_t.shape
    if use_pallas is None:
        # At small B this op is launch-overhead bound; plain XLA fuses it into one
        # tiny elementwise fusion and wins.  Only dispatch to Pallas for large batches.
        use_pallas = B >= _MIN_PALLAS_B

    if use_pallas:
        action, log_prob = _flow_sac_forward_pallas(x_t, act_limit)
    else:
        action, log_prob = _flow_sac_forward_xla(x_t, act_limit)

    # entropy = torch.mean(-log_prob, dim=0)  (use_mc_entropy=False branch)
    entropy = jnp.mean(-log_prob)
    # FlowSAC.get_value: value_net is None (use_value=False default) -> zeros.
    value = jnp.zeros((state.shape[0], 1), dtype=jnp.float32)
    return (action, log_prob, entropy), value


def _check(state, x_t, use_pallas):
    (action, log_prob, entropy), value = flow_sac_forward(state, x_t, use_pallas=use_pallas)
    jax.block_until_ready((action, log_prob, entropy, value))
    B, A = x_t.shape
    assert action.shape == (B, A)
    assert log_prob.shape == (B, 1)
    assert value.shape == (B, 1)
    assert entropy.shape == ()
    assert not bool(jnp.any(jnp.isnan(action)))
    assert not bool(jnp.any(jnp.isnan(log_prob)))
    assert not bool(jnp.isnan(entropy))
    ref_action, ref_log_prob = _flow_sac_forward_xla(x_t, ACT_LIMIT)
    assert bool(jnp.allclose(action, ref_action, rtol=1e-5, atol=1e-4))
    assert bool(jnp.allclose(log_prob, ref_log_prob, rtol=1e-5, atol=1e-4))


if __name__ == "__main__":
    key = jax.random.PRNGKey(0)
    k_state, k1, k2, k3 = jax.random.split(key, 4)
    num_inputs, num_outputs = 4, 2   # module defaults: small obs / 2-d action

    # (a) Pallas path, forced (default dispatch only uses Pallas for B >= _MIN_PALLAS_B).
    B = 1024
    state = jax.random.normal(k_state, (B, num_inputs), dtype=jnp.float32)
    x_t = jax.random.normal(k1, (B, num_outputs), dtype=jnp.float32)   # action_prior.rsample
    _check(state, x_t, use_pallas=True)

    # (b) ragged batch through Pallas (exercises the padding / un-packing path).
    B2 = 1000
    state2 = jax.random.normal(k2, (B2, num_inputs), dtype=jnp.float32)
    x_t2 = jax.random.normal(k3, (B2, num_outputs), dtype=jnp.float32)
    _check(state2, x_t2, use_pallas=True)

    # (c) tiny batch -> default dispatch takes the fused-XLA bypass.
    _check(state2[:64], x_t2[:64], use_pallas=None)

    print("KERNEL_OK")
</pallas_src>

<mosaic_0001>
module attributes {stable_mosaic.version = 11 : i64} {
  func.func @_flow_sac_kernel(%arg0: i32, %arg1: memref<8x256xf32, #tpu.memory_space<vmem>>, %arg2: memref<8x256xf32, #tpu.memory_space<vmem>>, %arg3: memref<4x256xf32, #tpu.memory_space<vmem>>) attributes {dimension_semantics = [#tpu.dimension_semantics<parallel>], iteration_bounds = array<i64: 1>, scalar_prefetch = 0 : i64, scratch_operands = 0 : i64, tpu.core_type = #tpu.core_type<tc>, window_params = [{transform_indices = @transform_0, window_bounds = array<i64: 8, 256>}, {transform_indices = @transform_1, window_bounds = array<i64: 8, 256>}, {transform_indices = @transform_2, window_bounds = array<i64: 4, 256>}]} {
    %c0 = arith.constant 0 : index
    %c0_0 = arith.constant 0 : index
    %0 = vector.load %arg1[%c0, %c0_0] : memref<8x256xf32, #tpu.memory_space<vmem>>, vector<8x256xf32>
    %cst = arith.constant -4.95171881 : f32
    %cst_1 = arith.constant 4.95171881 : f32
    %1 = vector.broadcast %cst : f32 to vector<8x256xf32>
    %2 = arith.maximumf %1, %0 : vector<8x256xf32>
    %3 = vector.broadcast %cst_1 : f32 to vector<8x256xf32>
    %4 = arith.minimumf %3, %2 : vector<8x256xf32>
    %5 = math.tanh %4 : vector<8x256xf32>
    %cst_2 = arith.constant 1.000000e+01 : f32
    %6 = vector.broadcast %cst_2 : f32 to vector<8x256xf32>
    %7 = arith.mulf %6, %5 : vector<8x256xf32>
    %c0_3 = arith.constant 0 : index
    %c0_4 = arith.constant 0 : index
    %8 = vector.load %arg2[%c0_3, %c0_4] : memref<8x256xf32, #tpu.memory_space<vmem>>, vector<8x256xf32>
    tpu.vector_store %arg2[%c0_3, %c0_4], %7 {strides = array<i32>} : memref<8x256xf32, #tpu.memory_space<vmem>>, vector<8x256xf32>,
    %9 = vector.extract_strided_slice %0 {offsets = [0, 0], sizes = [4, 256], strides = [1, 1]} : vector<8x256xf32> to vector<4x256xf32>
    %10 = vector.extract_strided_slice %5 {offsets = [0, 0], sizes = [4, 256], strides = [1, 1]} : vector<8x256xf32> to vector<4x256xf32>
    %11 = arith.mulf %9, %9 : vector<4x256xf32>
    %12 = arith.mulf %10, %10 : vector<4x256xf32>
    %cst_5 = arith.constant 1.000000e+00 : f32
    %13 = vector.broadcast %cst_5 : f32 to vector<4x256xf32>
    %14 = arith.subf %13, %12 : vector<4x256xf32>
    %15 = vector.extract_strided_slice %0 {offsets = [4, 0], sizes = [4, 256], strides = [1, 1]} : vector<8x256xf32> to vector<4x256xf32>
    %16 = vector.extract_strided_slice %5 {offsets = [4, 0], sizes = [4, 256], strides = [1, 1]} : vector<8x256xf32> to vector<4x256xf32>
    %17 = arith.mulf %15, %15 : vector<4x256xf32>
    %18 = arith.addf %11, %17 : vector<4x256xf32>
    %19 = arith.mulf %16, %16 : vector<4x256xf32>
    %cst_6 = arith.constant 1.000000e+00 : f32
    %20 = vector.broadcast %cst_6 : f32 to vector<4x256xf32>
    %21 = arith.subf %20, %19 : vector<4x256xf32>
    %22 = arith.mulf %14, %21 : vector<4x256xf32>
    %cst_7 = arith.constant -5.000000e-01 : f32
    %23 = vector.broadcast %cst_7 : f32 to vector<4x256xf32>
    %24 = arith.mulf %23, %18 : vector<4x256xf32>
    %25 = math.log %22 : vector<4x256xf32>
    %26 = arith.subf %24, %25 : vector<4x256xf32>
    %cst_8 = arith.constant -6.44304705 : f32
    %27 = vector.broadcast %cst_8 : f32 to vector<4x256xf32>
    %28 = arith.addf %26, %27 : vector<4x256xf32>
    %c0_9 = arith.constant 0 : index
    %c0_10 = arith.constant 0 : index
    %29 = vector.load %arg3[%c0_9, %c0_10] : memref<4x256xf32, #tpu.memory_space<vmem>>, vector<4x256xf32>
    tpu.vector_store %arg3[%c0_9, %c0_10], %28 {strides = array<i32>} : memref<4x256xf32, #tpu.memory_space<vmem>>, vector<4x256xf32>,
    return
  }
  func.func @transform_0(%arg0: i32) -> (i32, i32) {
    %c0_i32 = arith.constant 0 : i32
    %c0_i32_0 = arith.constant 0 : i32
    return %c0_i32, %arg0 : i32, i32
  }
  func.func @transform_1(%arg0: i32) -> (i32, i32) {
    %c0_i32 = arith.constant 0 : i32
    %c0_i32_0 = arith.constant 0 : i32
    return %c0_i32, %arg0 : i32, i32
  }
  func.func @transform_2(%arg0: i32) -> (i32, i32) {
    %c0_i32 = arith.constant 0 : i32
    %c0_i32_0 = arith.constant 0 : i32
    return %c0_i32, %arg0 : i32, i32
  }
}

</mosaic_0001>

<llo_original>
// kernel: tpu_custom_call.1
$region0: #{tpu_custom_call.1}
  #allocation0 [shape = 'u32[]', space=smem, size = 0x4, offset = 0x4, fixed_abs, tag = 'smem constant byte address 0x4 - core index']
  #allocation1 [shape = 'u32[72,128]{1,0:T(1,128)}', space=vmem, size = 0x9000, scoped, tag = 'internal scratch']
  %s0 = inlined_call_operand.hbm [shape: f32[8,256], index: 0, kind: input, shape index: {}]
  %s1 = inlined_call_operand.hbm [shape: f32[8,256], index: 1, kind: output, shape index: {0}]
  %s2 = inlined_call_operand.hbm [shape: f32[4,256], index: 2, kind: output, shape index: {1}]
  %3 = xla_tuple %s1, %s2
  %s4 = sld [smem:[#allocation0]]
  $region26: #{tpu_custom_call.1} parent=0
    _
  %s6 = ssub.s32 1, %s4
  %s7 = scalar_select 0, %s6, %s4
  $region1: #{tpu_custom_call.1} parent=0
    #allocation2 [shape = 'u8[8192]{0}', space=vmem, size = 0x2000, scoped, tag = 'input window, operand 0, single buffered']
    #allocation3 [shape = 's32[1]{0}', space=sflag, size = 0x4, scoped, tag = 'scoped memory for tpu_custom_call.1']
    #allocation4 [shape = 's32[1]{0}', space=sflag, size = 0x4, scoped, tag = 'scoped memory for tpu_custom_call.1']
    #allocation5 [shape = 'u8[8192]{0}', space=vmem, size = 0x2000, scoped, tag = 'output window, operand 0, single buffered']
    #allocation6 [shape = 'u8[4096]{0}', space=vmem, size = 0x1000, scoped, tag = 'output window, operand 1, single buffered']
    #allocation7 [shape = 's32[1]{0}', space=sflag, size = 0x4, scoped, tag = 'scoped memory for tpu_custom_call.1']
    %8 = vsyncpa [#allocation3], 0
    %9 = vsyncpa [#allocation4], 0
    %10 = vsyncpa [#allocation7], 0
    // Predicated region
    $region2: #{tpu_custom_call.1} parent=1 // pred_check
      _
    $region3: #{tpu_custom_call.1} parent=1 // pred_check_branch
      %12 = sbr.rel (0) target = $region5
    $region4: #{tpu_custom_call.1} parent=1 // pred_region
      %14 = vsyncadd [#allocation3], 0
      %s16 = sshll.u32 %s0, 4
      %s17 = int_to_ptr.hbm [resolvable:$true] %s16
      %s18 = sshll.u32 [#allocation2], 4
      %s19 = int_to_ptr.vmem [resolvable:$true] %s18
      %21 = dma.hbm_to_vmem [thread:$0]  %s17, 256, %s19, [#allocation3]
    $region5: #{tpu_custom_call.1} parent=1 // pred_fallthru
      _
    // Predicated region
    $region6: #{tpu_custom_call.1} parent=1 // pred_check
      _
    $region7: #{tpu_custom_call.1} parent=1 // pred_check_branch
      %23 = sbr.rel (0) target = $region9
    $region8: #{tpu_custom_call.1} parent=1 // pred_region
      %25 = dma.done [#allocation3], 256
    $region9: #{tpu_custom_call.1} parent=1 // pred_fallthru
      _
    %v26 = vld [vmem:[#allocation2] sm:$0xff]
    %v27 = vld [vmem:[#allocation2 + $0x8] sm:$0xff]
    %v28 = vmax.f32 %v26, -4.951719
    %v29 = vmax.f32 %v27, -4.951719
    %v30 = vmin.f32 %v28, 4.951719
    %v31 = vmin.f32 %v29, 4.951719
    %v32 = vtanh.pop %v30
    %v33 = vtanh.pop %v31
    %v34 = vmul.f32 %v32, 10.0
    %v35 = vmul.f32 %v33, 10.0
    %36 = vst [vmem:[#allocation5] sm:$0xff] %v34
    %37 = vst [vmem:[#allocation5 + $0x8] sm:$0xff] %v35
    %v38 = vmul.f32 %v26, %v26
    %v39 = vmul.f32 %v27, %v27
    %v40 = vmul.f32 %v32, %v32
    %v41 = vmul.f32 %v33, %v33
    %v42 = vsub.f32 1.0, %v40
    %v43 = vsub.f32 1.0, %v41
    %v46 = vrot.slane %v38, 4
    %v47 = vrot.slane %v39, 4
    %v50 = vadd.f32 %v38, %v46
    %v51 = vadd.f32 %v39, %v47
    %v54 = vrot.slane %v42, 4
    %v55 = vrot.slane %v43, 4
    %v58 = vmul.f32 %v42, %v54
    %v59 = vmul.f32 %v43, %v55
    %v60 = vmul.f32 %v50, -0.5
    %v61 = vmul.f32 %v51, -0.5
    %v62 = vlog2.pop %v58
    %v63 = vmul.f32 %v62, 0.6931472
    %v64 = vlog2.pop %v59
    %v65 = vmul.f32 %v64, 0.6931472
    %v66 = vsub.f32 %v60, %v63
    %v67 = vsub.f32 %v61, %v65
    %v68 = vadd.f32 %v66, -6.443047
    %v69 = vadd.f32 %v67, -6.443047
    %v72 = vrot.slane %v69, 4
    %vm73 = vcmask 1043456
    %v74 = vsel %vm73, %v68, %v72
    %76 = vst [vmem:[#allocation6] sm:$0xff] %v74
    // Predicated region
    $region10: #{tpu_custom_call.1} parent=1 // pred_check
      _
    $region11: #{tpu_custom_call.1} parent=1 // pred_check_branch
      %78 = sbr.rel (0) target = $region13
    $region12: #{tpu_custom_call.1} parent=1 // pred_region
      %80 = vsyncadd [#allocation4], 0
      %s82 = sshll.u32 [#allocation5], 4
      %s83 = int_to_ptr.vmem [resolvable:$true] %s82
      %s84 = sshll.u32 %s1, 4
      %s85 = int_to_ptr.hbm [resolvable:$true] %s84
      %87 = dma.vmem_to_hbm [thread:$0]  %s83, 256, %s85, [#allocation4]
    $region13: #{tpu_custom_call.1} parent=1 // pred_fallthru
      _
    // Predicated region
    $region14: #{tpu_custom_call.1} parent=1 // pred_check
      _
    $region15: #{tpu_custom_call.1} parent=1 // pred_check_branch
      %89 = sbr.rel (0) target = $region17
    $region16: #{tpu_custom_call.1} parent=1 // pred_region
      %91 = vsyncadd [#allocation7], 0
      %s93 = sshll.u32 [#allocation6], 4
      %s94 = int_to_ptr.vmem [resolvable:$true] %s93
      %s95 = sshll.u32 %s2, 4
      %s96 = int_to_ptr.hbm [resolvable:$true] %s95
      %98 = dma.vmem_to_hbm [thread:$0]  %s94, 128, %s96, [#allocation7]
    $region17: #{tpu_custom_call.1} parent=1 // pred_fallthru
      _
    // Predicated region
    $region18: #{tpu_custom_call.1} parent=1 // pred_check
      _
    $region19: #{tpu_custom_call.1} parent=1 // pred_check_branch
      %100 = sbr.rel (0) target = $region21
    $region20: #{tpu_custom_call.1} parent=1 // pred_region
      %102 = dma.done [#allocation4], 256
    $region21: #{tpu_custom_call.1} parent=1 // pred_fallthru
      _
    // Predicated region
    $region22: #{tpu_custom_call.1} parent=1 // pred_check
      _
    $region23: #{tpu_custom_call.1} parent=1 // pred_check_branch
      %104 = sbr.rel (0) target = $region25
    $region24: #{tpu_custom_call.1} parent=1 // pred_region
      %106 = dma.done [#allocation7], 128
    $region25: #{tpu_custom_call.1} parent=1 // pred_fallthru
      _
    %107 = vsyncpa [#allocation3], 1
    %108 = vsyncpa [#allocation4], 1
    %109 = vsyncpa [#allocation7], 1

</llo_original>
